<compile_context>
chip_gen: v7x
topology: tpu7x:2x2x1
jax: 0.10.0
libtpu: 0.0.40
codegen_flags: <defaults>
</compile_context>

<pallas_src>
import functools

import jax
import jax.numpy as jnp
from jax.experimental import pallas as pl
from jax.experimental.pallas import tpu as pltpu


def _round_up(n: int, m: int) -> int:
    return ((n + m - 1) // m) * m


def fused_mlp_kernel(x_ref, w_ref, b_ref, o_ref):
    # Single MXU push: (TILE_B, D_in) @ (D_in, C), f32 accumulation, + bias.
    out = jnp.dot(x_ref[...], w_ref[...],
                  preferred_element_type=jnp.float32)   # (TILE_B, C)
    o_ref[...] = (out + b_ref[...]).astype(o_ref.dtype)


@functools.partial(jax.jit, static_argnames=("tile_b",))
def mlp_forward(x, w1, b1, w2, b2, *, tile_b=512):
    """Forward of MlpModel: Linear(89->128) -> (identity) -> Linear(128->2)."""
    B, d_in = x.shape
    C = w2.shape[1]

    # Fold the two Linears (mathematically identical since no activation).
    # Cheap (89x128x2) and fused into the same jit as the pallas_call.
    w_fused = jnp.dot(w1, w2, preferred_element_type=jnp.float32)        # (D_in, C)
    b_fused = jnp.dot(b1, w2, preferred_element_type=jnp.float32) + b2   # (1, C)

    # Batch tile: multiple of 8 (sublane), capped so double-buffered f32
    # x tiles (< 1 MiB total at tile_b=512) fit comfortably on every chip.
    tb = min(tile_b, _round_up(B, 8))
    B_pad = _round_up(B, tb)
    if B_pad != B:
        x = jnp.pad(x, ((0, B_pad - B), (0, 0)))

    out = pl.pallas_call(
        fused_mlp_kernel,
        out_shape=jax.ShapeDtypeStruct((B_pad, C), jnp.float32),
        grid=(B_pad // tb,),
        in_specs=[
            pl.BlockSpec((tb, d_in), lambda i: (i, 0)),   # x: streamed over batch
            pl.BlockSpec((d_in, C), lambda i: (0, 0)),    # fused weight: resident
            pl.BlockSpec((1, C), lambda i: (0, 0)),       # fused bias: resident
        ],
        out_specs=pl.BlockSpec((tb, C), lambda i: (i, 0)),
        compiler_params=pltpu.CompilerParams(
            dimension_semantics=("parallel",),            # shard batch across TCs (v7x)
        ),
    )(x, w_fused, b_fused)
    return out[:B]


def init_params(key, input_dim=89, hidden=128, num_classes=2):
    # Deterministic init mimicking PyTorch nn.Linear default:
    # U(-1/sqrt(fan_in), 1/sqrt(fan_in)). Stored as [in, out] (transposed).
    k1, k2, k3, k4 = jax.random.split(key, 4)
    bound1 = 1.0 / jnp.sqrt(input_dim)
    w1 = jax.random.uniform(k1, (input_dim, hidden), jnp.float32, -bound1, bound1)
    b1 = jax.random.uniform(k2, (1, hidden), jnp.float32, -bound1, bound1)
    bound2 = 1.0 / jnp.sqrt(hidden)
    w2 = jax.random.uniform(k3, (hidden, num_classes), jnp.float32, -bound2, bound2)
    b2 = jax.random.uniform(k4, (1, num_classes), jnp.float32, -bound2, bound2)
    return w1, b1, w2, b2


if __name__ == "__main__":
    key = jax.random.PRNGKey(0)
    kx, kp, kx2 = jax.random.split(key, 3)

    B, D_IN, HIDDEN, NUM_CLASSES = 8, 89, 128, 2
    w1, b1, w2, b2 = init_params(kp, D_IN, HIDDEN, NUM_CLASSES)

    # Small batch (single grid step).
    x = jax.random.normal(kx, (B, D_IN), jnp.float32)
    out = jax.block_until_ready(mlp_forward(x, w1, b1, w2, b2))
    ref = (x @ w1 + b1) @ w2 + b2           # unfused two-matmul reference
    assert out.shape == (B, NUM_CLASSES)
    assert jnp.allclose(out, ref, atol=1e-4, rtol=1e-4)

    # Larger batch exercising the tiled/padded grid path (grid > 1).
    B2 = 200
    x2 = jax.random.normal(kx2, (B2, D_IN), jnp.float32)
    out2 = jax.block_until_ready(mlp_forward(x2, w1, b1, w2, b2, tile_b=64))
    ref2 = (x2 @ w1 + b1) @ w2 + b2
    assert out2.shape == (B2, NUM_CLASSES)
    assert jnp.allclose(out2, ref2, atol=1e-4, rtol=1e-4)

    print("KERNEL_OK")
</pallas_src>

<mosaic_0001>
module attributes {stable_mosaic.version = 11 : i64} {
  func.func @fused_mlp_kernel(%arg0: i32, %arg1: memref<8x89xf32, #tpu.memory_space<vmem>>, %arg2: memref<89x2xf32, #tpu.memory_space<vmem>>, %arg3: memref<1x2xf32, #tpu.memory_space<vmem>>, %arg4: memref<8x2xf32, #tpu.memory_space<vmem>>) attributes {dimension_semantics = [#tpu.dimension_semantics<parallel>], iteration_bounds = array<i64: 1>, scalar_prefetch = 0 : i64, scratch_operands = 0 : i64, tpu.core_type = #tpu.core_type<tc>, window_params = [{transform_indices = @transform_0, window_bounds = array<i64: 8, 89>}, {pipeline_mode = #tpu.pipeline_mode<synchronous>, transform_indices = @transform_1, window_bounds = array<i64: 89, 2>}, {pipeline_mode = #tpu.pipeline_mode<synchronous>, transform_indices = @transform_2, window_bounds = array<i64: 1, 2>}, {transform_indices = @transform_3, window_bounds = array<i64: 8, 2>}]} {
    %c0 = arith.constant 0 : index
    %c0_0 = arith.constant 0 : index
    %0 = vector.load %arg1[%c0, %c0_0] : memref<8x89xf32, #tpu.memory_space<vmem>>, vector<8x89xf32>
    %c0_1 = arith.constant 0 : index
    %c0_2 = arith.constant 0 : index
    %1 = vector.load %arg2[%c0_1, %c0_2] : memref<89x2xf32, #tpu.memory_space<vmem>>, vector<89x2xf32>
    %cst = arith.constant dense<0.000000e+00> : vector<8x2xf32>
    %2 = tpu.matmul %0, %1, %cst {dimension_numbers = #tpu.dot_dimension_numbers<[1], [0], [0], [1], [0, 0, 1, 1], [], []>} : vector<8x89xf32>, vector<89x2xf32>, vector<8x2xf32> -> vector<8x2xf32>
    %c0_3 = arith.constant 0 : index
    %c0_4 = arith.constant 0 : index
    %3 = vector.load %arg3[%c0_3, %c0_4] : memref<1x2xf32, #tpu.memory_space<vmem>>, vector<1x2xf32>
    %4 = vector.broadcast %3 : vector<1x2xf32> to vector<8x2xf32>
    %5 = arith.addf %2, %4 : vector<8x2xf32>
    %c0_5 = arith.constant 0 : index
    %c0_6 = arith.constant 0 : index
    %6 = vector.load %arg4[%c0_5, %c0_6] : memref<8x2xf32, #tpu.memory_space<vmem>>, vector<8x2xf32>
    tpu.vector_store %arg4[%c0_5, %c0_6], %5 {strides = array<i32>} : memref<8x2xf32, #tpu.memory_space<vmem>>, vector<8x2xf32>,
    return
  }
  func.func @transform_0(%arg0: i32) -> (i32, i32) {
    %c0_i32 = arith.constant 0 : i32
    %c0_i32_0 = arith.constant 0 : i32
    return %arg0, %c0_i32 : i32, i32
  }
  func.func @transform_1(%arg0: i32) -> (i32, i32) {
    %c0_i32 = arith.constant 0 : i32
    %c0_i32_0 = arith.constant 0 : i32
    %c0_i32_1 = arith.constant 0 : i32
    return %c0_i32, %c0_i32_0 : i32, i32
  }
  func.func @transform_2(%arg0: i32) -> (i32, i32) {
    %c0_i32 = arith.constant 0 : i32
    %c0_i32_0 = arith.constant 0 : i32
    %c0_i32_1 = arith.constant 0 : i32
    return %c0_i32, %c0_i32_0 : i32, i32
  }
  func.func @transform_3(%arg0: i32) -> (i32, i32) {
    %c0_i32 = arith.constant 0 : i32
    %c0_i32_0 = arith.constant 0 : i32
    return %arg0, %c0_i32 : i32, i32
  }
}

</mosaic_0001>

<llo_original>
// kernel: mlp_forward.1
$region0: #{mlp_forward.1}
  #allocation0 [shape = 'u32[]', space=smem, size = 0x4, offset = 0x4, fixed_abs, tag = 'smem constant byte address 0x4 - core index']
  #allocation1 [shape = 'u32[144,128]{1,0:T(1,128)}', space=vmem, size = 0x12000, scoped, tag = 'internal scratch']
  %s0 = inlined_call_operand.vmem [shape: f32[8,89], index: 0, kind: input, shape index: {}]
  %s1 = inlined_call_operand.vmem [shape: f32[89,2], index: 1, kind: input, shape index: {}]
  %s2 = inlined_call_operand.vmem [shape: f32[1,2], index: 2, kind: input, shape index: {}]
  %s3 = inlined_call_operand.vmem [shape: f32[8,2], index: 3, kind: output, shape index: {}]
  %s4 = sld [smem:[#allocation0]]
  $region22: #{mlp_forward.1} parent=0
    _
  %s6 = ssub.s32 1, %s4
  %s7 = scalar_select 0, %s6, %s4
  // Predicated region
  $region2: #{mlp_forward.1} parent=0 // pred_check
    _
  $region3: #{mlp_forward.1} parent=0 // pred_check_branch
    %9 = sbr.rel (0) target = $region5
  $region4: #{mlp_forward.1} parent=0 // pred_region
    _
  $region5: #{mlp_forward.1} parent=0 // pred_fallthru
    _
  // Predicated region
  $region6: #{mlp_forward.1} parent=0 // pred_check
    _
  $region7: #{mlp_forward.1} parent=0 // pred_check_branch
    %11 = sbr.rel (0) target = $region9
  $region8: #{mlp_forward.1} parent=0 // pred_region
    _
  $region9: #{mlp_forward.1} parent=0 // pred_fallthru
    _
  // Predicated region
  $region10: #{mlp_forward.1} parent=0 // pred_check
    _
  $region11: #{mlp_forward.1} parent=0 // pred_check_branch
    %13 = sbr.rel (0) target = $region13
  $region12: #{mlp_forward.1} parent=0 // pred_region
    _
  $region13: #{mlp_forward.1} parent=0 // pred_fallthru
    _
  %v14 = vld [vmem:[%s0] sm:$0xff]
  %v15 = vld [vmem:[%s1] sm:$0xff]
  %v16 = vld [vmem:[%s1 + $0x8] sm:$0xff]
  %v17 = vld [vmem:[%s1 + $0x10] sm:$0xff]
  %v18 = vld [vmem:[%s1 + $0x18] sm:$0xff]
  %v19 = vld [vmem:[%s1 + $0x20] sm:$0xff]
  %v20 = vld [vmem:[%s1 + $0x28] sm:$0xff]
  %v21 = vld [vmem:[%s1 + $0x30] sm:$0xff]
  %v22 = vld [vmem:[%s1 + $0x38] sm:$0xff]
  %v23 = vld [vmem:[%s1 + $0x40] sm:$0xff]
  %v24 = vld [vmem:[%s1 + $0x48] sm:$0xff]
  %v25 = vld [vmem:[%s1 + $0x50] sm:$0xff]
  %v26 = vld [vmem:[%s1 + $0x58] sm:$0x1]
  %v27 = vld [vmem:[%s2] sm:$0x1]
  %v29 = vlaneseq
  %v30 = vshrl.u32 %v29, 7
  %v31 = vsub.s32 0, %v30
  %v32 = vrot.slane %v27, %v31
  %vm34 = vcmask 728064
  %v36 = vsel %vm34, %v14, 0
  %vm38 = vcmask 1040384
  %v40 = vsel %vm38, %v26, 0
  %42 = vmatprep.subr.mxu0 0.0
  %43 = vmatpush1.msra.mxu0 %v15
  %44 = vmatprep.subr.mxu0 0.0
  %45 = vmatpush1.msra.mxu0 %v16
  %46 = vmatprep.subr.mxu0 0.0
  %47 = vmatpush1.msra.mxu0 %v17
  %48 = vmatprep.subr.mxu0 0.0
  %49 = vmatpush1.msra.mxu0 %v18
  %50 = vmatprep.subr.mxu0 0.0
  %51 = vmatpush1.msra.mxu0 %v19
  %52 = vmatprep.subr.mxu0 0.0
  %53 = vmatpush1.msra.mxu0 %v20
  %54 = vmatprep.subr.mxu0 0.0
  %55 = vmatpush1.msra.mxu0 %v21
  %56 = vmatprep.subr.mxu0 0.0
  %57 = vmatpush1.msra.mxu0 %v22
  %58 = vmatprep.subr.mxu0 0.0
  %59 = vmatpush1.msra.mxu0 %v23
  %60 = vmatprep.subr.mxu0 0.0
  %61 = vmatpush1.msra.mxu0 %v24
  %62 = vmatprep.subr.mxu0 0.0
  %63 = vmatpush1.msra.mxu0 %v25
  %64 = vmatprep.subr.mxu0 0.0
  %65 = vmatpush1.msra.mxu0 %v40
  %66 = vmatprep.subr.mxu0 0.0
  %67 = vmatpush1.msra.mxu0 0.0
  %68 = vmatprep.subr.mxu0 0.0
  %69 = vmatpush1.msra.mxu0 0.0
  %70 = vmatprep.subr.mxu0 0.0
  %71 = vmatpush1.msra.mxu0 0.0
  %72 = vmatprep.subr.mxu0 0.0
  %73 = vmatpush1.msra.mxu0 0.0
  %74 = vmatprep.subr.mxu0 0.0
  %75 = vmatpush1.msra.mxu0 0.0
  %76 = vmatprep.subr.mxu0 0.0
  %77 = vmatpush1.msra.mxu0 0.0
  %78 = vmatprep.subr.mxu0 0.0
  %79 = vmatpush1.msra.mxu0 0.0
  %80 = vmatprep.subr.mxu0 0.0
  %81 = vmatpush1.msra.mxu0 0.0
  %82 = vmatprep.subr.mxu0 0.0
  %83 = vmatpush1.msra.mxu0 0.0
  %84 = vmatprep.subr.mxu0 0.0
  %85 = vmatpush1.msra.mxu0 0.0
  %86 = vmatprep.subr.mxu0 0.0
  %87 = vmatpush1.msra.mxu0 0.0
  %88 = vmatprep.subr.mxu0 0.0
  %89 = vmatpush1.msra.mxu0 0.0
  %90 = vmatprep.subr.mxu0 0.0
  %91 = vmatpush1.msra.mxu0 0.0
  %92 = vmatprep.subr.mxu0 0.0
  %93 = vmatpush1.msra.mxu0 0.0
  %94 = vmatprep.subr.mxu0 0.0
  %95 = vmatpush1.msra.mxu0 0.0
  %96 = vmatprep.subr.mxu0 0.0
  %97 = vmatpush1.msra.mxu0 0.0
  %98 = vmatprep.subr.mxu0 0.0
  %99 = vmatpush1.msra.mxu0 0.0
  %100 = vmatprep.subr.mxu0 0.0
  %101 = vmatpush1.msra.mxu0 0.0
  %102 = vmatprep.subr.mxu0 0.0
  %103 = vmatpush1.msra.mxu0 0.0
  %104 = vmatprep.subr.mxu0 0.0
  %105 = vmatpush1.msra.mxu0 0.0
  %106 = vmatprep.mubr.f32.mxu0 0.0
  %107 = vmatmul.mubr.f32.gmra.mrb[0].mxu0 %v36
  %v108 = vpop.f32.mrb[0].mxu0
  %v109 = vadd.f32 %v32, %v108
  %v110 = vpop.f32.mrb[0].mxu0
  %111 = vdwg.mxu0
  %vm112 = vcmask 15360
  %113 = vst.msk [vmem:[%s3] sm:$0xff] %vm112, %v109
  // Predicated region
  $region14: #{mlp_forward.1} parent=0 // pred_check
    _
  $region15: #{mlp_forward.1} parent=0 // pred_check_branch
    %115 = sbr.rel (0) target = $region17
  $region16: #{mlp_forward.1} parent=0 // pred_region
    _
  $region17: #{mlp_forward.1} parent=0 // pred_fallthru
    _
  // Predicated region
  $region18: #{mlp_forward.1} parent=0 // pred_check
    _
  $region19: #{mlp_forward.1} parent=0 // pred_check_branch
    %117 = sbr.rel (0) target = $region21
  $region20: #{mlp_forward.1} parent=0 // pred_region
    _
  $region21: #{mlp_forward.1} parent=0 // pred_fallthru
    _

</llo_original>
